<compile_context>
chip_gen: v5e
topology: v5e:2x2
jax: 0.10.0
libtpu: 0.0.40
codegen_flags: <defaults>
</compile_context>

<pallas_src>
import functools

import jax
import jax.numpy as jnp
from jax.experimental import pallas as pl
from jax.experimental.pallas import tpu as pltpu


def _self_attn_disc_kernel(seq_ref, mask_ref, w1_ref, w2p_ref, wdp_ref, b_ref,
                           out_ref):
    TB, L, D = seq_ref.shape
    LANES = w1_ref.shape[1]

    x = seq_ref[...]                                        # (TB, L, D) f32

    # --- MXU: pre-activation  y = x @ W1pad  ---------------------------------
    # (TB, L, D) -> (TB*L, D) merges sublane dims only (lane axis D untouched).
    y = jnp.dot(x.reshape(TB * L, D), w1_ref[...],
                preferred_element_type=jnp.float32)         # (TB*L, LANES)
    a = jnp.tanh(y).reshape(TB, L, LANES)                   # sublane-only reshape

    # --- attention scores: VPU multiply + lane reduce -------------------------
    # w2pad is zero outside [0, H) so padded lanes never pollute the score.
    s = jnp.sum(a * w2p_ref[...].reshape(1, 1, LANES), axis=-1)   # (TB, L)

    # --- pooled discriminator operand:  xwd = seq @ wd  (pure VPU) ------------
    # (alpha @ seq) @ wd == alpha @ (seq @ wd); computed straight from seq so
    # it has no dependency on the MXU result and overlaps the matmul latency.
    xwd = jnp.sum(x * wdp_ref[...].reshape(1, 1, D), axis=-1)     # (TB, L)

    # --- masked_fill(mask, -inf) equivalent (additive; mask in {0, 1}) --------
    s = s - mask_ref[...] * 1e30

    # --- softmax over the sequence axis (exact division: the approx
    #     reciprocal previously exceeded the comparison tolerance) -------------
    m = jnp.max(s, axis=-1, keepdims=True)
    p = jnp.exp(s - m)
    alpha = p / jnp.sum(p, axis=-1, keepdims=True)                # (TB, L)

    # --- pooled logit + sigmoid ------------------------------------------------
    logit = jnp.sum(alpha * xwd, axis=-1, keepdims=True) + b_ref[0, 0]
    out_ref[...] = jax.nn.sigmoid(logit)                          # (TB, 1)


def prepare_weights(w1, w2, wd, bias):
    """Build lane-padded weights ONCE at load time (not per forward call)."""
    D, H = w1.shape
    LANES = ((H + 127) // 128) * 128          # round_up(H, 128); no Wd column
    w1pad = jnp.zeros((D, LANES), jnp.float32).at[:, :H].set(
        w1.astype(jnp.float32))
    w2pad = jnp.zeros((1, LANES), jnp.float32).at[0, :H].set(
        w2[:, 0].astype(jnp.float32))
    wdrow = wd[:, 0].astype(jnp.float32).reshape(1, D)
    bias2d = jnp.asarray(bias, jnp.float32).reshape(1, 1)
    return w1pad, w2pad, wdrow, bias2d


@functools.partial(jax.jit, static_argnames=("tile_b",))
def self_attn_discriminator(seq, mask, w1pad, w2pad, wdrow, bias2d,
                            *, tile_b=None):
    """seq: (B, L, D) f32; mask: (B, L) f32 (1 = pad); returns (B, 1) f32."""
    B, L, D = seq.shape
    LANES = w1pad.shape[1]
    if tile_b is None:
        tile_b = B                     # toy demo: one block; at scale use
    assert B % tile_b == 0             # a multiple of 8 (e.g. 256-512 rows)
    grid = (B // tile_b,)

    cost = pl.CostEstimate(
        flops=2 * B * L * D * LANES + 8 * B * L * LANES + 12 * B * L,
        transcendentals=B * L * LANES + B * L,   # tanh + exp
        bytes_accessed=4 * (seq.size + mask.size + w1pad.size + w2pad.size
                            + wdrow.size + B),
    )

    return pl.pallas_call(
        _self_attn_disc_kernel,
        out_shape=jax.ShapeDtypeStruct((B, 1), jnp.float32),
        grid=grid,
        in_specs=[
            pl.BlockSpec((tile_b, L, D), lambda b: (b, 0, 0)),      # seq tile
            pl.BlockSpec((tile_b, L), lambda b: (b, 0)),            # mask tile
            pl.BlockSpec((D, LANES), lambda b: (0, 0)),             # W1pad
            pl.BlockSpec((1, LANES), lambda b: (0, 0)),             # w2 row
            pl.BlockSpec((1, D), lambda b: (0, 0)),                 # wd row
            pl.BlockSpec((1, 1), lambda b: (0, 0),
                         memory_space=pltpu.MemorySpace.SMEM),      # bias
        ],
        out_specs=pl.BlockSpec((tile_b, 1), lambda b: (b, 0)),
        compiler_params=pltpu.CompilerParams(
            dimension_semantics=("parallel",)),
        cost_estimate=cost,
    )(seq.astype(jnp.float32), mask.astype(jnp.float32),
      w1pad, w2pad, wdrow, bias2d)


def _reference(seq, mask, w1, w2, wd, bias):
    hp = jax.lax.Precision.HIGHEST
    a = jnp.tanh(jnp.einsum("bld,dh->blh", seq, w1, precision=hp))
    s = jnp.einsum("blh,ho->blo", a, w2, precision=hp)[..., 0] - mask * 1e30
    alpha = jax.nn.softmax(s, axis=-1)
    vec = jnp.einsum("bl,bld->bd", alpha, seq, precision=hp)
    return jax.nn.sigmoid(jnp.dot(vec, wd, precision=hp) + bias.reshape(1, 1))


if __name__ == "__main__":
    # Small shapes consistent with the module's forward:
    # batch=2, seq_len=8, attn_input_size=32, attn_hidden_size=16
    B, L, D, H = 2, 8, 32, 16

    key = jax.random.PRNGKey(0)
    k_seq, k_w1, k_w2, k_wd, k_b = jax.random.split(key, 5)

    seq = jax.random.normal(k_seq, (B, L, D), dtype=jnp.float32)
    mask = jnp.zeros((B, L), dtype=jnp.float32)        # no padding (seq_mask=None)

    # Deterministic parameter init (shapes from __init__):
    #   selfAttention.ws1: Linear(D -> H, bias=False)
    #   selfAttention.ws2: Linear(H -> 1, bias=False)
    #   linear:            Linear(D -> 1) with bias
    w1 = jax.random.normal(k_w1, (D, H), dtype=jnp.float32) * 0.1
    w2 = jax.random.normal(k_w2, (H, 1), dtype=jnp.float32) * 0.1
    wd = jax.random.normal(k_wd, (D, 1), dtype=jnp.float32) * 0.1
    bias = jax.random.normal(k_b, (1,), dtype=jnp.float32) * 0.1

    # Padded weights built once (load time), reused across calls.
    w1pad, w2pad, wdrow, bias2d = prepare_weights(w1, w2, wd, bias)

    out = self_attn_discriminator(seq, mask, w1pad, w2pad, wdrow, bias2d)
    out = jax.block_until_ready(out)

    ref = _reference(seq, mask, w1, w2, wd, bias)
    assert out.shape == (B, 1)
    # Exact-division softmax => expected error ~1e-6; 5e-4 tolerance leaves
    # headroom for MXU multi-pass vs XLA einsum f32 rounding differences.
    assert jnp.allclose(out, ref, atol=5e-4, rtol=5e-4), (out, ref)

    print("KERNEL_OK")
</pallas_src>

<mosaic_0001>
module attributes {stable_mosaic.version = 11 : i64} {
  func.func @_self_attn_disc_kernel(%arg0: i32, %arg1: memref<2x8x32xf32, #tpu.memory_space<vmem>>, %arg2: memref<2x8xf32, #tpu.memory_space<vmem>>, %arg3: memref<32x128xf32, #tpu.memory_space<vmem>>, %arg4: memref<1x128xf32, #tpu.memory_space<vmem>>, %arg5: memref<1x32xf32, #tpu.memory_space<vmem>>, %arg6: memref<1x1xf32, #tpu.memory_space<smem>>, %arg7: memref<2x1xf32, #tpu.memory_space<vmem>>) attributes {dimension_semantics = [#tpu.dimension_semantics<parallel>], iteration_bounds = array<i64: 1>, scalar_prefetch = 0 : i64, scratch_operands = 0 : i64, tpu.core_type = #tpu.core_type<tc>, window_params = [{transform_indices = @transform_0, window_bounds = array<i64: 2, 8, 32>}, {transform_indices = @transform_1, window_bounds = array<i64: 2, 8>}, {pipeline_mode = #tpu.pipeline_mode<synchronous>, transform_indices = @transform_2, window_bounds = array<i64: 32, 128>}, {pipeline_mode = #tpu.pipeline_mode<synchronous>, transform_indices = @transform_3, window_bounds = array<i64: 1, 128>}, {pipeline_mode = #tpu.pipeline_mode<synchronous>, transform_indices = @transform_4, window_bounds = array<i64: 1, 32>}, {transform_indices = @transform_5, window_bounds = array<i64: 1, 1>}, {transform_indices = @transform_6, window_bounds = array<i64: 2, 1>}]} {
    %c0 = arith.constant 0 : index
    %c0_0 = arith.constant 0 : index
    %c0_1 = arith.constant 0 : index
    %0 = vector.load %arg1[%c0, %c0_0, %c0_1] : memref<2x8x32xf32, #tpu.memory_space<vmem>>, vector<2x8x32xf32>
    %1 = vector.shape_cast %0 : vector<2x8x32xf32> to vector<16x32xf32>
    %c0_2 = arith.constant 0 : index
    %c0_3 = arith.constant 0 : index
    %2 = vector.load %arg3[%c0_2, %c0_3] : memref<32x128xf32, #tpu.memory_space<vmem>>, vector<32x128xf32>
    %cst = arith.constant dense<0.000000e+00> : vector<16x128xf32>
    %3 = tpu.matmul %1, %2, %cst {dimension_numbers = #tpu.dot_dimension_numbers<[1], [0], [0], [1], [0, 0, 1, 1], [], []>} : vector<16x32xf32>, vector<32x128xf32>, vector<16x128xf32> -> vector<16x128xf32>
    %4 = math.tanh %3 : vector<16x128xf32>
    %5 = vector.shape_cast %4 : vector<16x128xf32> to vector<2x8x128xf32>
    %c0_4 = arith.constant 0 : index
    %c0_5 = arith.constant 0 : index
    %6 = vector.load %arg4[%c0_4, %c0_5] : memref<1x128xf32, #tpu.memory_space<vmem>>, vector<1x128xf32>
    %7 = vector.shape_cast %6 : vector<1x128xf32> to vector<1x1x128xf32>
    %8 = vector.broadcast %7 : vector<1x1x128xf32> to vector<2x8x128xf32>
    %9 = arith.mulf %5, %8 : vector<2x8x128xf32>
    %cst_6 = arith.constant dense<0.000000e+00> : vector<2x8xf32>
    %10 = vector.multi_reduction <add>, %9, %cst_6 [2] : vector<2x8x128xf32> to vector<2x8xf32>
    %c0_7 = arith.constant 0 : index
    %c0_8 = arith.constant 0 : index
    %11 = vector.load %arg5[%c0_7, %c0_8] : memref<1x32xf32, #tpu.memory_space<vmem>>, vector<1x32xf32>
    %12 = vector.shape_cast %11 : vector<1x32xf32> to vector<1x1x32xf32>
    %13 = vector.broadcast %12 : vector<1x1x32xf32> to vector<2x8x32xf32>
    %14 = arith.mulf %0, %13 : vector<2x8x32xf32>
    %cst_9 = arith.constant dense<0.000000e+00> : vector<2x8xf32>
    %15 = vector.multi_reduction <add>, %14, %cst_9 [2] : vector<2x8x32xf32> to vector<2x8xf32>
    %c0_10 = arith.constant 0 : index
    %c0_11 = arith.constant 0 : index
    %16 = vector.load %arg2[%c0_10, %c0_11] : memref<2x8xf32, #tpu.memory_space<vmem>>, vector<2x8xf32>
    %cst_12 = arith.constant 1.000000e+30 : f32
    %17 = vector.broadcast %cst_12 : f32 to vector<2x8xf32>
    %18 = arith.mulf %16, %17 : vector<2x8xf32>
    %19 = arith.subf %10, %18 : vector<2x8xf32>
    %cst_13 = arith.constant dense<0xFF800000> : vector<2xf32>
    %20 = vector.multi_reduction <maximumf>, %19, %cst_13 [1] : vector<2x8xf32> to vector<2xf32>
    %21 = vector.shape_cast %20 : vector<2xf32> to vector<2x1xf32>
    %22 = vector.broadcast %21 : vector<2x1xf32> to vector<2x8xf32>
    %23 = arith.subf %19, %22 : vector<2x8xf32>
    %24 = math.exp %23 : vector<2x8xf32>
    %cst_14 = arith.constant dense<0.000000e+00> : vector<2xf32>
    %25 = vector.multi_reduction <add>, %24, %cst_14 [1] : vector<2x8xf32> to vector<2xf32>
    %26 = vector.shape_cast %25 : vector<2xf32> to vector<2x1xf32>
    %27 = vector.broadcast %26 : vector<2x1xf32> to vector<2x8xf32>
    %28 = arith.divf %24, %27 : vector<2x8xf32>
    %29 = arith.mulf %28, %15 : vector<2x8xf32>
    %cst_15 = arith.constant dense<0.000000e+00> : vector<2xf32>
    %30 = vector.multi_reduction <add>, %29, %cst_15 [1] : vector<2x8xf32> to vector<2xf32>
    %31 = vector.shape_cast %30 : vector<2xf32> to vector<2x1xf32>
    %c0_16 = arith.constant 0 : index
    %c0_17 = arith.constant 0 : index
    %32 = memref.load %arg6[%c0_16, %c0_17] : memref<1x1xf32, #tpu.memory_space<smem>>
    %33 = vector.broadcast %32 : f32 to vector<2x1xf32>
    %34 = arith.addf %31, %33 : vector<2x1xf32>
    %35 = arith.negf %34 : vector<2x1xf32>
    %36 = math.exp %35 : vector<2x1xf32>
    %cst_18 = arith.constant 1.000000e+00 : f32
    %37 = vector.broadcast %cst_18 : f32 to vector<2x1xf32>
    %38 = arith.addf %37, %36 : vector<2x1xf32>
    %39 = arith.divf %37, %38 : vector<2x1xf32>
    %c0_19 = arith.constant 0 : index
    %c0_20 = arith.constant 0 : index
    %40 = vector.load %arg7[%c0_19, %c0_20] : memref<2x1xf32, #tpu.memory_space<vmem>>, vector<2x1xf32>
    tpu.vector_store %arg7[%c0_19, %c0_20], %39 {strides = array<i32>} : memref<2x1xf32, #tpu.memory_space<vmem>>, vector<2x1xf32>,
    return
  }
  func.func @transform_0(%arg0: i32) -> (i32, i32, i32) {
    %c0_i32 = arith.constant 0 : i32
    %c0_i32_0 = arith.constant 0 : i32
    %c0_i32_1 = arith.constant 0 : i32
    return %arg0, %c0_i32, %c0_i32_0 : i32, i32, i32
  }
  func.func @transform_1(%arg0: i32) -> (i32, i32) {
    %c0_i32 = arith.constant 0 : i32
    %c0_i32_0 = arith.constant 0 : i32
    return %arg0, %c0_i32 : i32, i32
  }
  func.func @transform_2(%arg0: i32) -> (i32, i32) {
    %c0_i32 = arith.constant 0 : i32
    %c0_i32_0 = arith.constant 0 : i32
    %c0_i32_1 = arith.constant 0 : i32
    return %c0_i32, %c0_i32_0 : i32, i32
  }
  func.func @transform_3(%arg0: i32) -> (i32, i32) {
    %c0_i32 = arith.constant 0 : i32
    %c0_i32_0 = arith.constant 0 : i32
    %c0_i32_1 = arith.constant 0 : i32
    return %c0_i32, %c0_i32_0 : i32, i32
  }
  func.func @transform_4(%arg0: i32) -> (i32, i32) {
    %c0_i32 = arith.constant 0 : i32
    %c0_i32_0 = arith.constant 0 : i32
    %c0_i32_1 = arith.constant 0 : i32
    return %c0_i32, %c0_i32_0 : i32, i32
  }
  func.func @transform_5(%arg0: i32) -> (i32, i32) {
    %c0_i32 = arith.constant 0 : i32
    %c0_i32_0 = arith.constant 0 : i32
    %c0_i32_1 = arith.constant 0 : i32
    return %c0_i32, %c0_i32_0 : i32, i32
  }
  func.func @transform_6(%arg0: i32) -> (i32, i32) {
    %c0_i32 = arith.constant 0 : i32
    %c0_i32_0 = arith.constant 0 : i32
    return %arg0, %c0_i32 : i32, i32
  }
}

</mosaic_0001>

<llo_original>
// kernel: self_attn_discriminator.1
$region0: #{self_attn_discriminator.1}
  #allocation0 [shape = 'u32[]', space=smem, size = 0x4, offset = 0x4, fixed_abs, tag = 'smem constant byte address 0x4 - core index']
  #allocation1 [shape = 'u32[72,128]{1,0:T(1,128)}', space=vmem, size = 0x9000, scoped, tag = 'internal scratch']
  #allocation2 [shape = 'f32[1,1]{1,0:T(1,128)S(6)}', space=smem, size = 0x200, scoped, tag = 'scoped memory for self_attn_discriminator.1']
  %s0 = inlined_call_operand.hbm [shape: f32[2,8,32], index: 0, kind: input, shape index: {}]
  %s1 = inlined_call_operand.vmem [shape: f32[2,8], index: 1, kind: input, shape index: {}]
  %s2 = inlined_call_operand.hbm [shape: f32[32,128], index: 2, kind: input, shape index: {}]
  %s3 = inlined_call_operand.vmem [shape: f32[1,128], index: 3, kind: input, shape index: {}]
  %s4 = inlined_call_operand.vmem [shape: f32[1,32], index: 4, kind: input, shape index: {}]
  %s5 = inlined_call_operand.<no memory space> [shape: f32[1,1], index: 5, kind: input, shape index: {}]
  %s6 = inlined_call_operand.vmem [shape: f32[2,1], index: 6, kind: output, shape index: {}]
  %s7 = sld [smem:[#allocation0]]
  $region42: #{self_attn_discriminator.1} parent=0
    _
  %s9 = ssub.s32 1, %s7
  %s10 = scalar_select 0, %s9, %s7
  %11 = sst [smem:[#allocation2]] %s5
  $region1: #{self_attn_discriminator.1} parent=0
    #allocation3 [shape = 'u8[8192]{0}', space=vmem, size = 0x2000, scoped, tag = 'input window, operand 0, single buffered']
    #allocation4 [shape = 's32[1]{0}', space=sflag, size = 0x4, scoped, tag = 'scoped memory for self_attn_discriminator.1']
    #allocation5 [shape = 'u8[16384]{0}', space=vmem, size = 0x4000, scoped, tag = 'input window, operand 2, single buffered']
    #allocation6 [shape = 's32[1]{0}', space=sflag, size = 0x4, scoped, tag = 'scoped memory for self_attn_discriminator.1']
    %12 = vsyncpa [#allocation4], 0
    %13 = vsyncpa [#allocation6], 0
    // Predicated region
    $region2: #{self_attn_discriminator.1} parent=1 // pred_check
      _
    $region3: #{self_attn_discriminator.1} parent=1 // pred_check_branch
      %15 = sbr.rel (0) target = $region5
    $region4: #{self_attn_discriminator.1} parent=1 // pred_region
      %17 = vsyncadd [#allocation4], 0
      %s18 = sshll.u32 %s0, 4
      %s19 = int_to_ptr.hbm [resolvable:$true] %s18
      %s20 = sshll.u32 [#allocation3], 4
      %s21 = int_to_ptr.vmem [resolvable:$true] %s20
      %26 = dma.hbm_to_vmem [thread:$0]  %s19, 256, %s21, [#allocation4], 128, 128, 8
    $region5: #{self_attn_discriminator.1} parent=1 // pred_fallthru
      _
    // Predicated region
    $region6: #{self_attn_discriminator.1} parent=1 // pred_check
      _
    $region7: #{self_attn_discriminator.1} parent=1 // pred_check_branch
      %28 = sbr.rel (0) target = $region9
    $region8: #{self_attn_discriminator.1} parent=1 // pred_region
      _
    $region9: #{self_attn_discriminator.1} parent=1 // pred_fallthru
      _
    // Predicated region
    $region10: #{self_attn_discriminator.1} parent=1 // pred_check
      _
    $region11: #{self_attn_discriminator.1} parent=1 // pred_check_branch
      %30 = sbr.rel (0) target = $region13
    $region12: #{self_attn_discriminator.1} parent=1 // pred_region
      %32 = vsyncadd [#allocation6], 0
      %s33 = sshll.u32 %s2, 4
      %s34 = int_to_ptr.hbm [resolvable:$true] %s33
      %s35 = sshll.u32 [#allocation5], 4
      %s36 = int_to_ptr.vmem [resolvable:$true] %s35
      %41 = dma.hbm_to_vmem [thread:$0]  %s34, 512, %s36, [#allocation6], 128, 128, 8
    $region13: #{self_attn_discriminator.1} parent=1 // pred_fallthru
      _
    // Predicated region
    $region14: #{self_attn_discriminator.1} parent=1 // pred_check
      _
    $region15: #{self_attn_discriminator.1} parent=1 // pred_check_branch
      %43 = sbr.rel (0) target = $region17
    $region16: #{self_attn_discriminator.1} parent=1 // pred_region
      _
    $region17: #{self_attn_discriminator.1} parent=1 // pred_fallthru
      _
    // Predicated region
    $region18: #{self_attn_discriminator.1} parent=1 // pred_check
      _
    $region19: #{self_attn_discriminator.1} parent=1 // pred_check_branch
      %45 = sbr.rel (0) target = $region21
    $region20: #{self_attn_discriminator.1} parent=1 // pred_region
      _
    $region21: #{self_attn_discriminator.1} parent=1 // pred_fallthru
      _
    // Predicated region
    $region22: #{self_attn_discriminator.1} parent=1 // pred_check
      _
    $region23: #{self_attn_discriminator.1} parent=1 // pred_check_branch
      %47 = sbr.rel (0) target = $region25
    $region24: #{self_attn_discriminator.1} parent=1 // pred_region
      _
    $region25: #{self_attn_discriminator.1} parent=1 // pred_fallthru
      _
    // Predicated region
    $region26: #{self_attn_discriminator.1} parent=1 // pred_check
      _
    $region27: #{self_attn_discriminator.1} parent=1 // pred_check_branch
      %49 = sbr.rel (0) target = $region29
    $region28: #{self_attn_discriminator.1} parent=1 // pred_region
      %51 = dma.done [#allocation4], 256
    $region29: #{self_attn_discriminator.1} parent=1 // pred_fallthru
      _
    // Predicated region
    $region30: #{self_attn_discriminator.1} parent=1 // pred_check
      _
    $region31: #{self_attn_discriminator.1} parent=1 // pred_check_branch
      %53 = sbr.rel (0) target = $region33
    $region32: #{self_attn_discriminator.1} parent=1 // pred_region
      %55 = dma.done [#allocation6], 512
    $region33: #{self_attn_discriminator.1} parent=1 // pred_fallthru
      _
    %v56 = vld [vmem:[#allocation3] sm:$0xff]
    %v57 = vld [vmem:[#allocation3 + $0x8] sm:$0xff]
    %v58 = vld [vmem:[#allocation5] sm:$0xff]
    %v59 = vld [vmem:[#allocation5 + $0x8] sm:$0xff]
    %v60 = vld [vmem:[#allocation5 + $0x10] sm:$0xff]
    %v61 = vld [vmem:[#allocation5 + $0x18] sm:$0xff]
    %vm62 = vcmask 261120
    %v64 = vsel %vm62, %v56, 0
    %v67 = vsel %vm62, %v57, 0
    %69 = vmatpush.msra.mxu0 0.0
    %70 = vmatpush.msra.mxu0 0.0
    %71 = vmatpush.msra.mxu0 0.0
    %72 = vmatpush.msra.mxu0 0.0
    %73 = vmatpush.msra.mxu0 0.0
    %74 = vmatpush.msra.mxu0 0.0
    %75 = vmatpush.msra.mxu0 0.0
    %76 = vmatpush.msra.mxu0 0.0
    %77 = vmatpush.msra.mxu0 0.0
    %78 = vmatpush.msra.mxu0 0.0
    %79 = vmatpush.msra.mxu0 0.0
    %80 = vmatpush.msra.mxu0 0.0
    %81 = vmatpush.msra.mxu0 %v61
    %82 = vmatpush.msra.mxu0 %v60
    %83 = vmatpush.msra.mxu0 %v59
    %84 = vmatpush.msra.mxu0 %v58
    %85 = vmatmul.f32.gmra.mxu0 %v64
    %v86 = vpop.f32.mrf.mxu0
    %v87 = vadd.f32 0.0, %v86
    %88 = vmatmul.f32.gmra.mxu0 %v67
    %v89 = vpop.f32.mrf.mxu0
    %v90 = vadd.f32 0.0, %v89
    %91 = vdwg.mxu0
    %v92 = vtanh.pop %v87
    %v93 = vtanh.pop %v90
    %v94 = vld [vmem:[%s3] sm:$0x1]
    %v96 = vperm.slane %v94, 0
    %v98 = vmul.f32 %v92, %v96
    %v99 = vmul.f32 %v93, %v96
    %100 = vadd.xlane.f32.xlu0 %v98
    %v101 = vpop.xlane.xlu0 %100
    %102 = vadd.xlane.f32.xlu0 %v99
    %v103 = vpop.xlane.xlu0 %102
    %v104 = vld [vmem:[%s4] sm:$0x1]
    %v106 = vperm.slane %v104, 0
    %v108 = vmul.f32 %v56, %v106
    %v109 = vmul.f32 %v57, %v106
    %v110 = vsel %vm62, %v108, 0.0
    %111 = vadd.xlane.f32.xlu0 %v110
    %v112 = vpop.xlane.xlu0 %111
    %v113 = vsel %vm62, %v109, 0.0
    %114 = vadd.xlane.f32.xlu0 %v113
    %v115 = vpop.xlane.xlu0 %114
    %v116 = vld [vmem:[%s1] sm:$0x3]
    %v117 = vmul.f32 %v116, 1e+30
    %v119 = vperm.slane %v117, 0
    %v120 = vlaneseq
    %v121 = vshrl.u32 %v120, 7
    %123 = vset.pattern.permute.xlu0 %v121
    %124 = vperm.xlu0 %123, %v119
    %v125 = vpop.permute.xlu0 %124
    %v126 = vperm.slane %v117, 1
    %v127 = vlaneseq
    %v128 = vshrl.u32 %v127, 7
    %130 = vset.pattern.permute.xlu0 %v128
    %131 = vperm.xlu0 %130, %v126
    %v132 = vpop.permute.xlu0 %131
    %v135 = vsub.f32 %v101, %v125
    %v136 = vsub.f32 %v103, %v132
    %139 = vset.pattern.permute.xlu0 0
    %140 = vperm.xlu0 %139, %v135
    %v141 = vpop.permute.xlu0 %140
    %142 = vset.pattern.permute.xlu0 0
    %143 = vperm.xlu0 %142, %v136
    %v144 = vpop.permute.xlu0 %143
    %v145 = vlaneseq
    %v146 = vand.u32 %v145, 127
    %v147 = vperm.slane %v141, %v146
    %v148 = vperm.slane %v144, %v146
    %vm149 = vcmask 1041409
    %v150 = vsel %vm149, %v148, %v147
    %vm152 = vcmask 58368
    %v153 = vsel %vm152, %v150, -inf
    %154 = vmax.xlane.f32.xlu0 %v153
    %v155 = vpop.xlane.xlu0 %154
    %v157 = vperm.slane %v155, 0
    %v158 = vperm.slane %v155, 1
    %v161 = vsub.f32 %v135, %v157
    %v162 = vsub.f32 %v136, %v158
    %v163 = vmul.f32 %v161, 1.442695
    %v164 = vpow.pop %v163
    %v165 = vmul.f32 %v162, 1.442695
    %v166 = vpow.pop %v165
    %169 = vset.pattern.permute.xlu0 0
    %170 = vperm.xlu0 %169, %v164
    %v171 = vpop.permute.xlu0 %170
    %172 = vset.pattern.permute.xlu0 0
    %173 = vperm.xlu0 %172, %v166
    %v174 = vpop.permute.xlu0 %173
    %v175 = vperm.slane %v171, %v146
    %v176 = vperm.slane %v174, %v146
    %v177 = vsel %vm149, %v176, %v175
    %v179 = vsel %vm152, %v177, 0.0
    %180 = vadd.xlane.f32.xlu0 %v179
    %v181 = vpop.xlane.xlu0 %180
    %v183 = vperm.slane %v181, 0
    %v184 = vperm.slane %v181, 1
    %v187 = vrcp.pop %v183
    %v188 = vmul.f32 %v183, %v187
    %v189 = vsub.f32 1.0, %v188
    %v190 = vmul.f32 %v187, %v189
    %v191 = vadd.f32 %v187, %v190
    %vm192 = vweird.f32 %v183
    %vm193 = vweird.f32 %v187
    %vm194 = vmor %vm192, %vm193
    %v195 = vsel %vm194, %v187, %v191
    %v196 = vand.u32 2147483647, %v183
    %vm197 = vcmp.eq.f32.partialorder %v196, 8.507059e+37
    %v198 = vand.u32 %v183, 2147483648
    %v199 = vor.u32 1.1754944e-38, %v198
    %v200 = vsel %vm197, %v199, %v195
    %v201 = vmul.f32 %v164, %v200
    %v202 = vrcp.pop %v184
    %v203 = vmul.f32 %v184, %v202
    %v204 = vsub.f32 1.0, %v203
    %v205 = vmul.f32 %v202, %v204
    %v206 = vadd.f32 %v202, %v205
    %vm207 = vweird.f32 %v184
    %vm208 = vweird.f32 %v202
    %vm209 = vmor %vm207, %vm208
    %v210 = vsel %vm209, %v202, %v206
    %v211 = vand.u32 2147483647, %v184
    %vm212 = vcmp.eq.f32.partialorder %v211, 8.507059e+37
    %v213 = vand.u32 %v184, 2147483648
    %v214 = vor.u32 1.1754944e-38, %v213
    %v215 = vsel %vm212, %v214, %v210
    %v216 = vmul.f32 %v166, %v215
    %v217 = vmul.f32 %v201, %v112
    %v218 = vmul.f32 %v216, %v115
    %221 = vset.pattern.permute.xlu0 0
    %222 = vperm.xlu0 %221, %v217
    %v223 = vpop.permute.xlu0 %222
    %224 = vset.pattern.permute.xlu0 0
    %225 = vperm.xlu0 %224, %v218
    %v226 = vpop.permute.xlu0 %225
    %v227 = vperm.slane %v223, %v146
    %v228 = vperm.slane %v226, %v146
    %v229 = vsel %vm149, %v228, %v227
    %v231 = vsel %vm152, %v229, 0.0
    %232 = vadd.xlane.f32.xlu0 %v231
    %v233 = vpop.xlane.xlu0 %232
    %s234 = sld [smem:[#allocation2]]
    %v235 = vstv %s234
    %v236 = vadd.f32 %v233, %v235
    %v237 = vxor.u32 %v236, 2147483648
    %v238 = vmul.f32 %v237, 1.442695
    %v239 = vpow.pop %v238
    %v240 = vadd.f32 %v239, 1.0
    %v241 = vrcp.pop %v240
    %v242 = vmul.f32 %v240, %v241
    %v243 = vsub.f32 1.0, %v242
    %v244 = vmul.f32 %v241, %v243
    %v245 = vadd.f32 %v241, %v244
    %vm246 = vweird.f32 %v240
    %vm247 = vweird.f32 %v241
    %vm248 = vmor %vm246, %vm247
    %v249 = vsel %vm248, %v241, %v245
    %v250 = vand.u32 2147483647, %v240
    %vm251 = vcmp.eq.f32.partialorder %v250, 8.507059e+37
    %v252 = vand.u32 %v240, 2147483648
    %v253 = vor.u32 1.1754944e-38, %v252
    %v254 = vsel %vm251, %v253, %v249
    %v255 = vmul.f32 1.0, %v254
    %vm256 = vcmask 1024
    %257 = vst.msk [vmem:[%s6] sm:$0x3] %vm256, %v255
    // Predicated region
    $region34: #{self_attn_discriminator.1} parent=1 // pred_check
      _
    $region35: #{self_attn_discriminator.1} parent=1 // pred_check_branch
      %259 = sbr.rel (0) target = $region37
    $region36: #{self_attn_discriminator.1} parent=1 // pred_region
      _
    $region37: #{self_attn_discriminator.1} parent=1 // pred_fallthru
      _
    // Predicated region
    $region38: #{self_attn_discriminator.1} parent=1 // pred_check
      _
    $region39: #{self_attn_discriminator.1} parent=1 // pred_check_branch
      %261 = sbr.rel (0) target = $region41
    $region40: #{self_attn_discriminator.1} parent=1 // pred_region
      _
    $region41: #{self_attn_discriminator.1} parent=1 // pred_fallthru
      _
    %262 = vsyncpa [#allocation4], 1
    %263 = vsyncpa [#allocation6], 1

</llo_original>
